<compile_context>
chip_gen: v5e
topology: v5e:2x2
jax: 0.10.0
libtpu: 0.0.40
codegen_flags: <defaults>
</compile_context>

<pallas_src>
import jax
import jax.numpy as jnp
from jax.experimental import pallas as pl
from jax.experimental.pallas import tpu as pltpu


def chomp1d_kernel(x_ref, o_ref):
    # Pure copy of one (bm, bn) lane-dense tile.  Input and output tiles share
    # the same offsets because the discarded region sits at the end of each row.
    o_ref[...] = x_ref[...]


def _pick_tiles(M, KH, itemsize, vmem_budget_bytes=16 * 1024 * 1024):
    """Largest lane-dense tile that stays within a conservative VMEM budget."""
    # Lane (last) dim: power-of-two multiple of 128, as wide as useful.
    bn = 128
    while bn < 8192 and bn < KH:
        bn *= 2
    # Sublane (batch) dim: full M when small / not 8-aligned (allowed because a
    # block dim may equal the full array dim), otherwise an 8-aligned tile.
    if M <= 8 or M % 8 != 0:
        bm = M
    else:
        bm = min(M, 512)
        bm -= bm % 8
    # Input + output, each double-buffered by the pipeline -> 4 live tiles.
    while 4 * bm * bn * itemsize > vmem_budget_bytes and bn > 128:
        bn //= 2
    while 4 * bm * bn * itemsize > vmem_budget_bytes and bm > 8 and M % 8 == 0:
        bm = max(8, (bm // 2) - ((bm // 2) % 8))
    return bm, bn


def chomp1d(x, chomp_size):
    """x: [M, Kpad, H] -> [M, Kpad - chomp_size, H] (drop the tail along dim 1)."""
    M, Kpad, H = x.shape
    if not (0 < chomp_size < Kpad):
        raise ValueError("chomp_size must be in (0, Kpad)")
    K = Kpad - chomp_size
    KH = K * H

    # Lane-dense 2-D view: per-batch flattening keeps the kept region contiguous
    # at the front of each row (identical offsets for input and output blocks).
    x2 = x.reshape(M, Kpad * H)

    itemsize = jnp.dtype(x.dtype).itemsize
    bm, bn = _pick_tiles(M, KH, itemsize)
    grid = (pl.cdiv(M, bm), pl.cdiv(KH, bn))

    out2 = pl.pallas_call(
        chomp1d_kernel,
        out_shape=jax.ShapeDtypeStruct((M, KH), x.dtype),
        grid_spec=pltpu.PrefetchScalarGridSpec(
            num_scalar_prefetch=0,
            grid=grid,
            in_specs=[pl.BlockSpec((bm, bn), lambda i, j: (i, j))],
            out_specs=pl.BlockSpec((bm, bn), lambda i, j: (i, j)),
        ),
        compiler_params=pltpu.CompilerParams(
            dimension_semantics=("parallel", "parallel"),
        ),
        cost_estimate=pl.CostEstimate(
            flops=0,
            transcendentals=0,
            bytes_accessed=2 * M * KH * itemsize,
        ),
    )(x2)
    return out2.reshape(M, K, H)


def chomp1d_reference(x, chomp_size):
    return x[:, :-chomp_size, :]


if __name__ == "__main__":
    key = jax.random.PRNGKey(0)
    k1, k2, k3 = jax.random.split(key, 3)

    # Test 1: lane-friendly shape (K*H multiple of 128) -> fully unmasked stores.
    M, Kpad, H, chomp = 2, 72, 32, 8
    x = jax.random.normal(k1, (M, Kpad, H), dtype=jnp.float32)
    out = jax.block_until_ready(chomp1d(x, chomp))
    ref = chomp1d_reference(x, chomp)
    assert out.shape == (M, Kpad - chomp, H)
    assert jnp.array_equal(out, ref)

    # Test 2: the module docstring's example shape (10, 110, 5) with chomp 10 —
    # exercises the masked edge block (K*H = 500, not a multiple of 128).
    x_b = jax.random.normal(k2, (10, 110, 5), dtype=jnp.float32)
    out_b = jax.block_until_ready(chomp1d(x_b, 10))
    ref_b = chomp1d_reference(x_b, 10)
    assert out_b.shape == (10, 100, 5)
    assert jnp.array_equal(out_b, ref_b)

    # Test 3: 8-aligned batch + bf16 -> exercises the sublane-tiling path.
    x_c = jax.random.normal(k3, (16, 40, 24), dtype=jnp.bfloat16)
    out_c = jax.block_until_ready(chomp1d(x_c, 4))
    ref_c = chomp1d_reference(x_c, 4)
    assert out_c.shape == (16, 36, 24)
    assert jnp.array_equal(out_c, ref_c)

    print("KERNEL_OK")
</pallas_src>

<mosaic_0001>
module attributes {stable_mosaic.version = 11 : i64} {
  func.func @chomp1d_kernel(%arg0: i32, %arg1: i32, %arg2: memref<2x2048xf32, #tpu.memory_space<vmem>>, %arg3: memref<2x2048xf32, #tpu.memory_space<vmem>>) attributes {dimension_semantics = [#tpu.dimension_semantics<parallel>, #tpu.dimension_semantics<parallel>], iteration_bounds = array<i64: 1, 1>, scalar_prefetch = 0 : i64, scratch_operands = 0 : i64, tpu.core_type = #tpu.core_type<tc>, window_params = [{transform_indices = @transform_0, window_bounds = array<i64: 2, 2048>}, {transform_indices = @transform_1, window_bounds = array<i64: 2, 2048>}]} {
    %c0 = arith.constant 0 : index
    %c0_0 = arith.constant 0 : index
    %0 = vector.load %arg2[%c0, %c0_0] : memref<2x2048xf32, #tpu.memory_space<vmem>>, vector<2x2048xf32>
    %c0_1 = arith.constant 0 : index
    %c0_2 = arith.constant 0 : index
    %1 = vector.load %arg3[%c0_1, %c0_2] : memref<2x2048xf32, #tpu.memory_space<vmem>>, vector<2x2048xf32>
    tpu.vector_store %arg3[%c0_1, %c0_2], %0 {strides = array<i32>} : memref<2x2048xf32, #tpu.memory_space<vmem>>, vector<2x2048xf32>,
    return
  }
  func.func @transform_0(%arg0: i32, %arg1: i32) -> (i32, i32) {
    %c0_i32 = arith.constant 0 : i32
    return %arg0, %arg1 : i32, i32
  }
  func.func @transform_1(%arg0: i32, %arg1: i32) -> (i32, i32) {
    %c0_i32 = arith.constant 0 : i32
    return %arg0, %arg1 : i32, i32
  }
}

</mosaic_0001>

<llo_original>
// kernel: tpu_custom_call.1
$region0: #{tpu_custom_call.1}
  #allocation0 [shape = 'u32[]', space=smem, size = 0x4, offset = 0x4, fixed_abs, tag = 'smem constant byte address 0x4 - core index']
  #allocation1 [shape = 'u32[72,128]{1,0:T(1,128)}', space=vmem, size = 0x9000, scoped, tag = 'internal scratch']
  %s0 = inlined_call_operand.hbm [shape: f32[2,2304], index: 0, kind: input, shape index: {}]
  %s1 = inlined_call_operand.hbm [shape: f32[2,2048], index: 1, kind: output, shape index: {}]
  %s2 = sld [smem:[#allocation0]]
  $region18: #{tpu_custom_call.1} parent=0
    _
  %s4 = ssub.s32 1, %s2
  %s5 = scalar_select 0, %s4, %s2
  $region1: #{tpu_custom_call.1} parent=0
    #allocation2 [shape = 'u8[16384]{0}', space=vmem, size = 0x4000, scoped, tag = 'input window, operand 0, single buffered']
    #allocation3 [shape = 's32[1]{0}', space=sflag, size = 0x4, scoped, tag = 'scoped memory for tpu_custom_call.1']
    #allocation4 [shape = 's32[1]{0}', space=sflag, size = 0x4, scoped, tag = 'scoped memory for tpu_custom_call.1']
    #allocation5 [shape = 'u8[16384]{0}', space=vmem, size = 0x4000, scoped, tag = 'output window, operand 0, single buffered']
    %6 = vsyncpa [#allocation3], 0
    %7 = vsyncpa [#allocation4], 0
    // Predicated region
    $region2: #{tpu_custom_call.1} parent=1 // pred_check
      _
    $region3: #{tpu_custom_call.1} parent=1 // pred_check_branch
      %9 = sbr.rel (0) target = $region5
    $region4: #{tpu_custom_call.1} parent=1 // pred_region
      %11 = vsyncadd [#allocation3], 0
      %s13 = sshll.u32 %s0, 4
      %s14 = int_to_ptr.hbm [resolvable:$true] %s13
      %s15 = sshll.u32 [#allocation2], 4
      %s16 = int_to_ptr.vmem [resolvable:$true] %s15
      %18 = dma.hbm_to_vmem [thread:$0]  %s14, 512, %s16, [#allocation3]
    $region5: #{tpu_custom_call.1} parent=1 // pred_fallthru
      _
    // Predicated region
    $region6: #{tpu_custom_call.1} parent=1 // pred_check
      _
    $region7: #{tpu_custom_call.1} parent=1 // pred_check_branch
      %20 = sbr.rel (0) target = $region9
    $region8: #{tpu_custom_call.1} parent=1 // pred_region
      %22 = dma.done [#allocation3], 512
    $region9: #{tpu_custom_call.1} parent=1 // pred_fallthru
      _
    %v23 = vld [vmem:[#allocation2] sm:$0xff]
    %v24 = vld [vmem:[#allocation2 + $0x8] sm:$0xff]
    %v25 = vld [vmem:[#allocation2 + $0x10] sm:$0xff]
    %v26 = vld [vmem:[#allocation2 + $0x18] sm:$0xff]
    %27 = vst [vmem:[#allocation5] sm:$0xff] %v23
    %28 = vst [vmem:[#allocation5 + $0x8] sm:$0xff] %v24
    %29 = vst [vmem:[#allocation5 + $0x10] sm:$0xff] %v25
    %30 = vst [vmem:[#allocation5 + $0x18] sm:$0xff] %v26
    // Predicated region
    $region10: #{tpu_custom_call.1} parent=1 // pred_check
      _
    $region11: #{tpu_custom_call.1} parent=1 // pred_check_branch
      %32 = sbr.rel (0) target = $region13
    $region12: #{tpu_custom_call.1} parent=1 // pred_region
      %34 = vsyncadd [#allocation4], 0
      %s36 = sshll.u32 [#allocation5], 4
      %s37 = int_to_ptr.vmem [resolvable:$true] %s36
      %s38 = sshll.u32 %s1, 4
      %s39 = int_to_ptr.hbm [resolvable:$true] %s38
      %41 = dma.vmem_to_hbm [thread:$0]  %s37, 512, %s39, [#allocation4]
    $region13: #{tpu_custom_call.1} parent=1 // pred_fallthru
      _
    // Predicated region
    $region14: #{tpu_custom_call.1} parent=1 // pred_check
      _
    $region15: #{tpu_custom_call.1} parent=1 // pred_check_branch
      %43 = sbr.rel (0) target = $region17
    $region16: #{tpu_custom_call.1} parent=1 // pred_region
      %45 = dma.done [#allocation4], 512
    $region17: #{tpu_custom_call.1} parent=1 // pred_fallthru
      _
    %46 = vsyncpa [#allocation3], 1
    %47 = vsyncpa [#allocation4], 1

</llo_original>
